<compile_context>
chip_gen: v6e
topology: v6e:2x2x1
jax: 0.10.0
libtpu: 0.0.40
codegen_flags: <defaults>
</compile_context>

<pallas_src>
import functools

import jax
import jax.numpy as jnp
from jax import lax
from jax.experimental import pallas as pl
from jax.experimental.pallas import tpu as pltpu


def _round_up(x, m):
    return ((x + m - 1) // m) * m


# ----------------------------------------------------------------------------
# Linear forward: out = X @ W + b
# ----------------------------------------------------------------------------
def _linear_nosplit_kernel(x_ref, w_ref, b_ref, o_ref):
    # X arrives f32 (or pre-cast bf16 when the N grid is wide); the in-kernel cast
    # rides the VPU and is hidden under the MXU.  W is pre-cast bf16 at init.
    xb = x_ref[...].astype(jnp.bfloat16)
    acc = jnp.dot(xb, w_ref[...], preferred_element_type=jnp.float32)
    o_ref[...] = (acc + b_ref[...]).astype(o_ref.dtype)


def _linear_ksplit_kernel(x_ref, w_ref, b_ref, o_ref, acc_ref):
    k = pl.program_id(2)
    xb = x_ref[...].astype(jnp.bfloat16)
    p = jnp.dot(xb, w_ref[...], preferred_element_type=jnp.float32)

    @pl.when(k == 0)
    def _init():
        acc_ref[...] = p

    @pl.when(k != 0)
    def _accumulate():
        acc_ref[...] += p

    @pl.when(k == pl.num_programs(2) - 1)
    def _finalize():
        o_ref[...] = (acc_ref[...] + b_ref[...]).astype(o_ref.dtype)


def _linear_tiles(M, K, N):
    # Full-dim blocks for small dims (legal even when not (8,128)-multiples);
    # aligned tiles + cdiv grids otherwise (M/N tail garbage is never written back).
    tm = M if M <= 256 else 256
    tn = N if N <= 512 else 256
    if K <= 2048:
        tk = K                      # collapse the reduction axis entirely
    else:
        for cand in (2048, 1024, 512, 256, 128):
            if K % cand == 0:
                tk = cand
                break
        else:
            raise ValueError(f"K={K} must be a multiple of 128 for K-split tiling")
    return tm, tn, tk


def pallas_linear(x, w_bf16, b_2d):
    """x: [M, K] f32, w_bf16: [K, N] bf16 (pre-cast once), b_2d: [1, N] f32."""
    M, K = x.shape
    K2, N = w_bf16.shape
    assert K == K2 and b_2d.shape == (1, N)

    tm, tn, tk = _linear_tiles(M, K, N)
    gm, gn = pl.cdiv(M, tm), pl.cdiv(N, tn)

    # If each X block is re-read many times across the N grid, a single host cast
    # (4+2 B/elem once) beats repeated f32 reads; otherwise cast in-kernel.
    x_in = x if gn <= 2 else x.astype(jnp.bfloat16)

    if tk == K:
        return pl.pallas_call(
            _linear_nosplit_kernel,
            out_shape=jax.ShapeDtypeStruct((M, N), x.dtype),
            grid=(gm, gn),
            in_specs=[
                pl.BlockSpec((tm, K), lambda i, j: (i, 0)),
                pl.BlockSpec((K, tn), lambda i, j: (0, j)),
                pl.BlockSpec((1, tn), lambda i, j: (0, j)),
            ],
            out_specs=pl.BlockSpec((tm, tn), lambda i, j: (i, j)),
            compiler_params=pltpu.CompilerParams(
                dimension_semantics=("parallel", "parallel")),
        )(x_in, w_bf16, b_2d)

    gk = K // tk
    return pl.pallas_call(
        _linear_ksplit_kernel,
        out_shape=jax.ShapeDtypeStruct((M, N), x.dtype),
        grid=(gm, gn, gk),
        in_specs=[
            pl.BlockSpec((tm, tk), lambda i, j, k: (i, k)),
            pl.BlockSpec((tk, tn), lambda i, j, k: (k, j)),
            pl.BlockSpec((1, tn), lambda i, j, k: (0, j)),
        ],
        out_specs=pl.BlockSpec((tm, tn), lambda i, j, k: (i, j)),
        scratch_shapes=[pltpu.VMEM((tm, tn), jnp.float32)],
        compiler_params=pltpu.CompilerParams(
            dimension_semantics=("parallel", "parallel", "arbitrary")),
    )(x_in, w_bf16, b_2d)


# ----------------------------------------------------------------------------
# Mean MSE: no padding, full-D block, VPU-only per-step accumulation
# ----------------------------------------------------------------------------
def _mse_kernel(pred_ref, tgt_ref, o_ref, acc_ref, *, m_total, tr, inv_n):
    i = pl.program_id(0)

    @pl.when(i == 0)
    def _init():
        acc_ref[...] = jnp.zeros_like(acc_ref)

    d = pred_ref[...].astype(jnp.float32) - tgt_ref[...].astype(jnp.float32)
    sq = d * d
    if m_total % tr != 0:  # static: emit the row-tail mask only when needed
        row = i * tr + lax.broadcasted_iota(jnp.int32, sq.shape, 0)
        sq = jnp.where(row < m_total, sq, 0.0)
    # Elementwise adds of (8, D) row-groups (pure VPU); the single cross-lane
    # reduce happens only once, in the final step.
    acc_ref[...] += sq.reshape(tr // 8, 8, sq.shape[-1]).sum(axis=0)

    @pl.when(i == pl.num_programs(0) - 1)
    def _finalize():
        total = jnp.sum(acc_ref[...]) * jnp.float32(inv_n)
        o_ref[...] = total.reshape(1, 1)


def pallas_mse_loss(pred, target):
    M, D = pred.shape
    assert target.shape == (M, D)
    tr = min(128, _round_up(M, 8))
    gm = pl.cdiv(M, tr)
    out = pl.pallas_call(
        functools.partial(_mse_kernel, m_total=M, tr=tr, inv_n=1.0 / float(M * D)),
        out_shape=jax.ShapeDtypeStruct((1, 1), jnp.float32),
        grid=(gm,),
        in_specs=[
            pl.BlockSpec((tr, D), lambda i: (i, 0)),
            pl.BlockSpec((tr, D), lambda i: (i, 0)),
        ],
        out_specs=pl.BlockSpec((1, 1), lambda i: (0, 0)),
        scratch_shapes=[pltpu.VMEM((8, D), jnp.float32)],
        compiler_params=pltpu.CompilerParams(dimension_semantics=("arbitrary",)),
    )(pred, target)
    return out[0, 0]


# ----------------------------------------------------------------------------
# Fused forward + MSE (training step): loss computed in the matmul epilogue
# ----------------------------------------------------------------------------
def _linear_mse_fused_kernel(x_ref, w_ref, b_ref, tgt_ref, o_ref, part_ref,
                             *, m_total, n_total, tm, tn):
    i, j = pl.program_id(0), pl.program_id(1)
    xb = x_ref[...].astype(jnp.bfloat16)
    out = jnp.dot(xb, w_ref[...], preferred_element_type=jnp.float32) + b_ref[...]
    o_ref[...] = out.astype(o_ref.dtype)

    d = out - tgt_ref[...].astype(jnp.float32)
    sq = d * d
    if (m_total % tm != 0) or (n_total % tn != 0):  # static tail masking
        row = i * tm + lax.broadcasted_iota(jnp.int32, sq.shape, 0)
        col = j * tn + lax.broadcasted_iota(jnp.int32, sq.shape, 1)
        sq = jnp.where((row < m_total) & (col < n_total), sq, 0.0)
    s = jnp.sum(sq)
    # One lane-aligned (8,128) tile per (i,j) block: the partial sum sits at [0,0]
    # and zeros elsewhere.  Keeps M/N "parallel" (no shared resident accumulator)
    # while respecting (8,128) output tiling; JAX finishes the tiny sum outside.
    r = lax.broadcasted_iota(jnp.int32, (8, 128), 0)
    c = lax.broadcasted_iota(jnp.int32, (8, 128), 1)
    part_ref[...] = jnp.where((r == 0) & (c == 0), s, jnp.float32(0.0))


def pallas_linear_mse(x, w_bf16, b_2d, target):
    M, K = x.shape
    K2, N = w_bf16.shape
    assert K == K2 and b_2d.shape == (1, N) and target.shape == (M, N)
    tm, tn, tk = _linear_tiles(M, K, N)
    if tk != K:
        # K too large for a single-tile epilogue: fall back to two kernels.
        out = pallas_linear(x, w_bf16, b_2d)
        return out, pallas_mse_loss(out, target)

    gm, gn = pl.cdiv(M, tm), pl.cdiv(N, tn)
    x_in = x if gn <= 2 else x.astype(jnp.bfloat16)
    out, parts = pl.pallas_call(
        functools.partial(_linear_mse_fused_kernel,
                          m_total=M, n_total=N, tm=tm, tn=tn),
        out_shape=(jax.ShapeDtypeStruct((M, N), x.dtype),
                   jax.ShapeDtypeStruct((8 * gm, 128 * gn), jnp.float32)),
        grid=(gm, gn),
        in_specs=[
            pl.BlockSpec((tm, K), lambda i, j: (i, 0)),
            pl.BlockSpec((K, tn), lambda i, j: (0, j)),
            pl.BlockSpec((1, tn), lambda i, j: (0, j)),
            pl.BlockSpec((tm, tn), lambda i, j: (i, j)),
        ],
        out_specs=(pl.BlockSpec((tm, tn), lambda i, j: (i, j)),
                   pl.BlockSpec((8, 128), lambda i, j: (i, j))),
        compiler_params=pltpu.CompilerParams(
            dimension_semantics=("parallel", "parallel")),
    )(x_in, w_bf16, b_2d, target)
    loss = jnp.sum(parts) * (1.0 / float(M * N))
    return out, loss


# ----------------------------------------------------------------------------
# JAX-side "Module" equivalent
# ----------------------------------------------------------------------------
class PallasModule:
    """Mirror of the PyTorch base Module with a concrete Linear `net`."""

    def __init__(self, in_features, out_features, lr=1e-3, key=None):
        self.lr = lr
        self.metrics = {"loss": 0.0}
        key = jax.random.PRNGKey(42) if key is None else key
        kw, kb = jax.random.split(key)
        scale = 1.0 / jnp.sqrt(in_features)
        w = jax.random.uniform(kw, (in_features, out_features), jnp.float32, -scale, scale)
        b = jax.random.uniform(kb, (out_features,), jnp.float32, -scale, scale)
        self.w, self.b = w, b                       # f32 master copies
        # Pre-cast / pre-shape ONCE — weights are static across forward calls, so
        # no per-call pad/cast HBM passes.
        self.w_bf16 = w.astype(jnp.bfloat16)
        self.b_2d = b.reshape(1, out_features).astype(jnp.float32)

    def forward(self, X):
        # forward(X) = self.net(X); net = Linear(in_features, out_features)
        return pallas_linear(X, self.w_bf16, self.b_2d)

    __call__ = forward

    def loss(self, inp, target, averaged=True):
        if averaged:
            return pallas_mse_loss(inp, target)
        return (inp - target) ** 2  # 'none' reduction: elementwise glue, not hot path

    def step(self, *batch):
        """Training-step loss: MSE fused into the matmul epilogue (no HBM
        round-trip of the activations, single kernel launch)."""
        *inputs, target = batch
        _, loss = pallas_linear_mse(inputs[0], self.w_bf16, self.b_2d, target)
        self.metrics["loss"] += float(loss)
        return loss

    # TODO(synk): configure_optimizers (torch.optim.Adam) and the Metrics class are
    # training-loop glue with no Pallas equivalent; omitted.


# ----------------------------------------------------------------------------
# Main
# ----------------------------------------------------------------------------
if __name__ == "__main__":
    key = jax.random.PRNGKey(0)
    kx, kt = jax.random.split(key)

    batch, d_in, d_out = 16, 512, 192   # small; exercises a non-128-multiple N
    X = jax.random.normal(kx, (batch, d_in), jnp.float32)
    target = jax.random.normal(kt, (batch, d_out), jnp.float32)

    model = PallasModule(d_in, d_out, lr=1e-3)

    # forward pass (single-step Pallas matmul kernel, K axis collapsed)
    out = jax.block_until_ready(model(X))

    # standalone loss kernel (Module.loss)
    loss = jax.block_until_ready(model.loss(out, target))

    # fused forward+loss (Module.step training path)
    fused_loss = jax.block_until_ready(model.step(X, target))

    # sanity checks vs pure-JAX reference (same bf16-input / f32-accum contract)
    xb = X.astype(jnp.bfloat16).astype(jnp.float32)
    wb = model.w_bf16.astype(jnp.float32)
    ref_out = jnp.dot(xb, wb, precision=jax.lax.Precision.HIGHEST) + model.b
    ref_loss = jnp.mean((out - target) ** 2)

    assert out.shape == (batch, d_out)
    assert jnp.allclose(out, ref_out, atol=1e-2, rtol=1e-2)
    assert jnp.allclose(loss, ref_loss, atol=1e-5, rtol=1e-4)
    assert jnp.allclose(fused_loss, ref_loss, atol=1e-5, rtol=1e-4)

    print("KERNEL_OK")
</pallas_src>

<mosaic_0001>
module attributes {stable_mosaic.version = 11 : i64} {
  func.func @_linear_nosplit_kernel(%arg0: i32, %arg1: i32, %arg2: memref<16x512xf32, #tpu.memory_space<vmem>>, %arg3: memref<512x192xbf16, #tpu.memory_space<vmem>>, %arg4: memref<1x192xf32, #tpu.memory_space<vmem>>, %arg5: memref<16x192xf32, #tpu.memory_space<vmem>>) attributes {dimension_semantics = [#tpu.dimension_semantics<parallel>, #tpu.dimension_semantics<parallel>], iteration_bounds = array<i64: 1, 1>, scalar_prefetch = 0 : i64, scratch_operands = 0 : i64, tpu.core_type = #tpu.core_type<tc>, window_params = [{transform_indices = @transform_0, window_bounds = array<i64: 16, 512>}, {transform_indices = @transform_1, window_bounds = array<i64: 512, 192>}, {transform_indices = @transform_2, window_bounds = array<i64: 1, 192>}, {transform_indices = @transform_3, window_bounds = array<i64: 16, 192>}]} {
    %c0 = arith.constant 0 : index
    %c0_0 = arith.constant 0 : index
    %0 = vector.load %arg2[%c0, %c0_0] : memref<16x512xf32, #tpu.memory_space<vmem>>, vector<16x512xf32>
    %1 = arith.truncf %0 : vector<16x512xf32> to vector<16x512xbf16>
    %c0_1 = arith.constant 0 : index
    %c0_2 = arith.constant 0 : index
    %2 = vector.load %arg3[%c0_1, %c0_2] : memref<512x192xbf16, #tpu.memory_space<vmem>>, vector<512x192xbf16>
    %cst = arith.constant dense<0.000000e+00> : vector<16x192xf32>
    %3 = tpu.matmul %1, %2, %cst {dimension_numbers = #tpu.dot_dimension_numbers<[1], [0], [0], [1], [0, 0, 1, 1], [], []>} : vector<16x512xbf16>, vector<512x192xbf16>, vector<16x192xf32> -> vector<16x192xf32>
    %c0_3 = arith.constant 0 : index
    %c0_4 = arith.constant 0 : index
    %4 = vector.load %arg4[%c0_3, %c0_4] : memref<1x192xf32, #tpu.memory_space<vmem>>, vector<1x192xf32>
    %5 = vector.broadcast %4 : vector<1x192xf32> to vector<16x192xf32>
    %6 = arith.addf %3, %5 : vector<16x192xf32>
    %c0_5 = arith.constant 0 : index
    %c0_6 = arith.constant 0 : index
    %7 = vector.load %arg5[%c0_5, %c0_6] : memref<16x192xf32, #tpu.memory_space<vmem>>, vector<16x192xf32>
    tpu.vector_store %arg5[%c0_5, %c0_6], %6 {strides = array<i32>} : memref<16x192xf32, #tpu.memory_space<vmem>>, vector<16x192xf32>,
    return
  }
  func.func @transform_0(%arg0: i32, %arg1: i32) -> (i32, i32) {
    %c0_i32 = arith.constant 0 : i32
    %c0_i32_0 = arith.constant 0 : i32
    return %arg0, %c0_i32 : i32, i32
  }
  func.func @transform_1(%arg0: i32, %arg1: i32) -> (i32, i32) {
    %c0_i32 = arith.constant 0 : i32
    %c0_i32_0 = arith.constant 0 : i32
    return %c0_i32, %arg1 : i32, i32
  }
  func.func @transform_2(%arg0: i32, %arg1: i32) -> (i32, i32) {
    %c0_i32 = arith.constant 0 : i32
    %c0_i32_0 = arith.constant 0 : i32
    return %c0_i32, %arg1 : i32, i32
  }
  func.func @transform_3(%arg0: i32, %arg1: i32) -> (i32, i32) {
    %c0_i32 = arith.constant 0 : i32
    return %arg0, %arg1 : i32, i32
  }
}

</mosaic_0001>

<llo_original>
// kernel: tpu_custom_call.1
$region0: #{tpu_custom_call.1}
  #allocation0 [shape = 'u32[]', space=smem, size = 0x4, offset = 0x4, fixed_abs, tag = 'smem constant byte address 0x4 - core index']
  #allocation1 [shape = 'u32[144,128]{1,0:T(1,128)}', space=vmem, size = 0x12000, scoped, tag = 'internal scratch']
  %s0 = inlined_call_operand.vmem [shape: f32[16,512], index: 0, kind: input, shape index: {}]
  %s1 = inlined_call_operand.vmem [shape: bf16[512,192], index: 1, kind: input, shape index: {}]
  %s2 = inlined_call_operand.vmem [shape: f32[1,192], index: 2, kind: input, shape index: {}]
  %s3 = inlined_call_operand.hbm [shape: f32[16,192], index: 3, kind: output, shape index: {}]
  %s4 = sld [smem:[#allocation0]]
  $region22: #{tpu_custom_call.1} parent=0
    _
  %s6 = ssub.s32 1, %s4
  %s7 = scalar_select 0, %s6, %s4
  $region1: #{tpu_custom_call.1} parent=0
    #allocation2 [shape = 'u8[16384]{0}', space=vmem, size = 0x4000, scoped, tag = 'output window, operand 0, single buffered']
    #allocation3 [shape = 's32[1]{0}', space=sflag, size = 0x4, scoped, tag = 'scoped memory for tpu_custom_call.1']
    %8 = vsyncpa [#allocation3], 0
    // Predicated region
    $region2: #{tpu_custom_call.1} parent=1 // pred_check
      _
    $region3: #{tpu_custom_call.1} parent=1 // pred_check_branch
      %10 = sbr.rel (0) target = $region5
    $region4: #{tpu_custom_call.1} parent=1 // pred_region
      _
    $region5: #{tpu_custom_call.1} parent=1 // pred_fallthru
      _
    // Predicated region
    $region6: #{tpu_custom_call.1} parent=1 // pred_check
      _
    $region7: #{tpu_custom_call.1} parent=1 // pred_check_branch
      %12 = sbr.rel (0) target = $region9
    $region8: #{tpu_custom_call.1} parent=1 // pred_region
      _
    $region9: #{tpu_custom_call.1} parent=1 // pred_fallthru
      _
    // Predicated region
    $region10: #{tpu_custom_call.1} parent=1 // pred_check
      _
    $region11: #{tpu_custom_call.1} parent=1 // pred_check_branch
      %14 = sbr.rel (0) target = $region13
    $region12: #{tpu_custom_call.1} parent=1 // pred_region
      _
    $region13: #{tpu_custom_call.1} parent=1 // pred_fallthru
      _
    %v15 = vld [vmem:[%s0] sm:$0xff]
    %v16 = vld [vmem:[%s0 + $0x8] sm:$0xff]
    %v17 = vld [vmem:[%s0 + $0x10] sm:$0xff]
    %v18 = vld [vmem:[%s0 + $0x18] sm:$0xff]
    %v19 = vld [vmem:[%s0 + $0x20] sm:$0xff]
    %v20 = vld [vmem:[%s0 + $0x28] sm:$0xff]
    %v21 = vld [vmem:[%s0 + $0x30] sm:$0xff]
    %v22 = vld [vmem:[%s0 + $0x38] sm:$0xff]
    %v23 = vpack.c.bf16 %v19, %v15
    %v24 = vpack.c.bf16 %v20, %v16
    %v25 = vpack.c.bf16 %v21, %v17
    %v26 = vpack.c.bf16 %v22, %v18
    %v27 = vld [vmem:[%s1] sm:$0xff]
    %v28 = vld [vmem:[%s1 + $0x8] sm:$0xff]
    %v29 = vld [vmem:[%s1 + $0x10] sm:$0xff]
    %v30 = vld [vmem:[%s1 + $0x18] sm:$0xff]
    %v31 = vld [vmem:[%s1 + $0x20] sm:$0xff]
    %v32 = vld [vmem:[%s1 + $0x28] sm:$0xff]
    %v33 = vld [vmem:[%s1 + $0x30] sm:$0xff]
    %v34 = vld [vmem:[%s1 + $0x38] sm:$0xff]
    %v35 = vld [vmem:[%s1 + $0x40] sm:$0xff]
    %v36 = vld [vmem:[%s1 + $0x48] sm:$0xff]
    %v37 = vld [vmem:[%s1 + $0x50] sm:$0xff]
    %v38 = vld [vmem:[%s1 + $0x58] sm:$0xff]
    %v39 = vld [vmem:[%s1 + $0x60] sm:$0xff]
    %v40 = vld [vmem:[%s1 + $0x68] sm:$0xff]
    %v41 = vld [vmem:[%s1 + $0x70] sm:$0xff]
    %v42 = vld [vmem:[%s1 + $0x78] sm:$0xff]
    %v43 = vld [vmem:[%s1 + $0x80] sm:$0xff]
    %v44 = vld [vmem:[%s1 + $0x88] sm:$0xff]
    %v45 = vld [vmem:[%s1 + $0x90] sm:$0xff]
    %v46 = vld [vmem:[%s1 + $0x98] sm:$0xff]
    %v47 = vld [vmem:[%s1 + $0xa0] sm:$0xff]
    %v48 = vld [vmem:[%s1 + $0xa8] sm:$0xff]
    %v49 = vld [vmem:[%s1 + $0xb0] sm:$0xff]
    %v50 = vld [vmem:[%s1 + $0xb8] sm:$0xff]
    %v51 = vld [vmem:[%s1 + $0xc0] sm:$0xff]
    %v52 = vld [vmem:[%s1 + $0xc8] sm:$0xff]
    %v53 = vld [vmem:[%s1 + $0xd0] sm:$0xff]
    %v54 = vld [vmem:[%s1 + $0xd8] sm:$0xff]
    %v55 = vld [vmem:[%s1 + $0xe0] sm:$0xff]
    %v56 = vld [vmem:[%s1 + $0xe8] sm:$0xff]
    %v57 = vld [vmem:[%s1 + $0xf0] sm:$0xff]
    %v58 = vld [vmem:[%s1 + $0xf8] sm:$0xff]
    %v59 = vld [vmem:[%s1 + $0x100] sm:$0xff]
    %v60 = vld [vmem:[%s1 + $0x108] sm:$0xff]
    %v61 = vld [vmem:[%s1 + $0x110] sm:$0xff]
    %v62 = vld [vmem:[%s1 + $0x118] sm:$0xff]
    %v63 = vld [vmem:[%s1 + $0x120] sm:$0xff]
    %v64 = vld [vmem:[%s1 + $0x128] sm:$0xff]
    %v65 = vld [vmem:[%s1 + $0x130] sm:$0xff]
    %v66 = vld [vmem:[%s1 + $0x138] sm:$0xff]
    %v67 = vld [vmem:[%s1 + $0x140] sm:$0xff]
    %v68 = vld [vmem:[%s1 + $0x148] sm:$0xff]
    %v69 = vld [vmem:[%s1 + $0x150] sm:$0xff]
    %v70 = vld [vmem:[%s1 + $0x158] sm:$0xff]
    %v71 = vld [vmem:[%s1 + $0x160] sm:$0xff]
    %v72 = vld [vmem:[%s1 + $0x168] sm:$0xff]
    %v73 = vld [vmem:[%s1 + $0x170] sm:$0xff]
    %v74 = vld [vmem:[%s1 + $0x178] sm:$0xff]
    %v75 = vld [vmem:[%s1 + $0x180] sm:$0xff]
    %v76 = vld [vmem:[%s1 + $0x188] sm:$0xff]
    %v77 = vld [vmem:[%s1 + $0x190] sm:$0xff]
    %v78 = vld [vmem:[%s1 + $0x198] sm:$0xff]
    %v79 = vld [vmem:[%s1 + $0x1a0] sm:$0xff]
    %v80 = vld [vmem:[%s1 + $0x1a8] sm:$0xff]
    %v81 = vld [vmem:[%s1 + $0x1b0] sm:$0xff]
    %v82 = vld [vmem:[%s1 + $0x1b8] sm:$0xff]
    %v83 = vld [vmem:[%s1 + $0x1c0] sm:$0xff]
    %v84 = vld [vmem:[%s1 + $0x1c8] sm:$0xff]
    %v85 = vld [vmem:[%s1 + $0x1d0] sm:$0xff]
    %v86 = vld [vmem:[%s1 + $0x1d8] sm:$0xff]
    %v87 = vld [vmem:[%s1 + $0x1e0] sm:$0xff]
    %v88 = vld [vmem:[%s1 + $0x1e8] sm:$0xff]
    %v89 = vld [vmem:[%s1 + $0x1f0] sm:$0xff]
    %v90 = vld [vmem:[%s1 + $0x1f8] sm:$0xff]
    %v91 = vld [vmem:[%s2] sm:$0x3]
    %v93 = vlaneseq
    %v94 = vshrl.u32 %v93, 7
    %v95 = vsub.s32 0, %v94
    %v96 = vrot.slane %v91, %v95
    %v97 = vlaneseq
    %v98 = vshrl.u32 %v97, 7
    %v99 = vsub.s32 1, %v98
    %v100 = vrot.slane %v91, %v99
    %v167 = vunpack.c.l.b16 %v27
    %v168 = vunpack.c.h.b16 %v27
    %v169 = vunpack.c.l.b16 %v28
    %v170 = vunpack.c.h.b16 %v28
    %v171 = vunpack.c.l.b16 %v29
    %v172 = vunpack.c.h.b16 %v29
    %v173 = vunpack.c.l.b16 %v30
    %v174 = vunpack.c.h.b16 %v30
    %v175 = vunpack.c.l.b16 %v31
    %v176 = vunpack.c.h.b16 %v31
    %v177 = vunpack.c.l.b16 %v32
    %v178 = vunpack.c.h.b16 %v32
    %v179 = vunpack.c.l.b16 %v33
    %v180 = vunpack.c.h.b16 %v33
    %v181 = vunpack.c.l.b16 %v34
    %v182 = vunpack.c.h.b16 %v34
    %v183 = vunpack.c.l.b16 %v35
    %v184 = vunpack.c.h.b16 %v35
    %v185 = vunpack.c.l.b16 %v36
    %v186 = vunpack.c.h.b16 %v36
    %v187 = vunpack.c.l.b16 %v37
    %v188 = vunpack.c.h.b16 %v37
    %v189 = vunpack.c.l.b16 %v38
    %v190 = vunpack.c.h.b16 %v38
    %v191 = vunpack.c.l.b16 %v39
    %v192 = vunpack.c.h.b16 %v39
    %v193 = vunpack.c.l.b16 %v40
    %v194 = vunpack.c.h.b16 %v40
    %v195 = vunpack.c.l.b16 %v41
    %v196 = vunpack.c.h.b16 %v41
    %v197 = vunpack.c.l.b16 %v42
    %v198 = vunpack.c.h.b16 %v42
    %v199 = vunpack.c.l.b16 %v43
    %v200 = vunpack.c.h.b16 %v43
    %v201 = vunpack.c.l.b16 %v44
    %v202 = vunpack.c.h.b16 %v44
    %v203 = vunpack.c.l.b16 %v45
    %v204 = vunpack.c.h.b16 %v45
    %v205 = vunpack.c.l.b16 %v46
    %v206 = vunpack.c.h.b16 %v46
    %v207 = vunpack.c.l.b16 %v47
    %v208 = vunpack.c.h.b16 %v47
    %v209 = vunpack.c.l.b16 %v48
    %v210 = vunpack.c.h.b16 %v48
    %v211 = vunpack.c.l.b16 %v49
    %v212 = vunpack.c.h.b16 %v49
    %v213 = vunpack.c.l.b16 %v50
    %v214 = vunpack.c.h.b16 %v50
    %v215 = vunpack.c.l.b16 %v51
    %v216 = vunpack.c.h.b16 %v51
    %v217 = vunpack.c.l.b16 %v52
    %v218 = vunpack.c.h.b16 %v52
    %v219 = vunpack.c.l.b16 %v53
    %v220 = vunpack.c.h.b16 %v53
    %v221 = vunpack.c.l.b16 %v54
    %v222 = vunpack.c.h.b16 %v54
    %v223 = vunpack.c.l.b16 %v55
    %v224 = vunpack.c.h.b16 %v55
    %v225 = vunpack.c.l.b16 %v56
    %v226 = vunpack.c.h.b16 %v56
    %v227 = vunpack.c.l.b16 %v57
    %v228 = vunpack.c.h.b16 %v57
    %v229 = vunpack.c.l.b16 %v58
    %v230 = vunpack.c.h.b16 %v58
    %v231 = vunpack.c.l.b16 %v59
    %v232 = vunpack.c.h.b16 %v59
    %v233 = vunpack.c.l.b16 %v60
    %v234 = vunpack.c.h.b16 %v60
    %v235 = vunpack.c.l.b16 %v61
    %v236 = vunpack.c.h.b16 %v61
    %v237 = vunpack.c.l.b16 %v62
    %v238 = vunpack.c.h.b16 %v62
    %v239 = vunpack.c.l.b16 %v63
    %v240 = vunpack.c.h.b16 %v63
    %v241 = vunpack.c.l.b16 %v64
    %v242 = vunpack.c.h.b16 %v64
    %v243 = vunpack.c.l.b16 %v65
    %v244 = vunpack.c.h.b16 %v65
    %v245 = vunpack.c.l.b16 %v66
    %v246 = vunpack.c.h.b16 %v66
    %v247 = vunpack.c.l.b16 %v67
    %v248 = vunpack.c.h.b16 %v67
    %v249 = vunpack.c.l.b16 %v68
    %v250 = vunpack.c.h.b16 %v68
    %v251 = vunpack.c.l.b16 %v69
    %v252 = vunpack.c.h.b16 %v69
    %v253 = vunpack.c.l.b16 %v70
    %v254 = vunpack.c.h.b16 %v70
    %v255 = vunpack.c.l.b16 %v71
    %v256 = vunpack.c.h.b16 %v71
    %v257 = vunpack.c.l.b16 %v72
    %v258 = vunpack.c.h.b16 %v72
    %v259 = vunpack.c.l.b16 %v73
    %v260 = vunpack.c.h.b16 %v73
    %v261 = vunpack.c.l.b16 %v74
    %v262 = vunpack.c.h.b16 %v74
    %v263 = vunpack.c.l.b16 %v75
    %v264 = vunpack.c.h.b16 %v75
    %v265 = vunpack.c.l.b16 %v76
    %v266 = vunpack.c.h.b16 %v76
    %v267 = vunpack.c.l.b16 %v77
    %v268 = vunpack.c.h.b16 %v77
    %v269 = vunpack.c.l.b16 %v78
    %v270 = vunpack.c.h.b16 %v78
    %v271 = vunpack.c.l.b16 %v79
    %v272 = vunpack.c.h.b16 %v79
    %v273 = vunpack.c.l.b16 %v80
    %v274 = vunpack.c.h.b16 %v80
    %v275 = vunpack.c.l.b16 %v81
    %v276 = vunpack.c.h.b16 %v81
    %v277 = vunpack.c.l.b16 %v82
    %v278 = vunpack.c.h.b16 %v82
    %v279 = vunpack.c.l.b16 %v83
    %v280 = vunpack.c.h.b16 %v83
    %v281 = vunpack.c.l.b16 %v84
    %v282 = vunpack.c.h.b16 %v84
    %v283 = vunpack.c.l.b16 %v85
    %v284 = vunpack.c.h.b16 %v85
    %v285 = vunpack.c.l.b16 %v86
    %v286 = vunpack.c.h.b16 %v86
    %v287 = vunpack.c.l.b16 %v87
    %v288 = vunpack.c.h.b16 %v87
    %v289 = vunpack.c.l.b16 %v88
    %v290 = vunpack.c.h.b16 %v88
    %v291 = vunpack.c.l.b16 %v89
    %v292 = vunpack.c.h.b16 %v89
    %v293 = vunpack.c.l.b16 %v90
    %v294 = vunpack.c.h.b16 %v90
    %v295 = vpack.c.b16 %v169, %v167
    %v296 = vpack.c.b16 %v170, %v168
    %v297 = vpack.c.b16 %v173, %v171
    %v298 = vpack.c.b16 %v174, %v172
    %v299 = vpack.c.b16 %v177, %v175
    %v300 = vpack.c.b16 %v178, %v176
    %v301 = vpack.c.b16 %v181, %v179
    %v302 = vpack.c.b16 %v182, %v180
    %v303 = vpack.c.b16 %v185, %v183
    %v304 = vpack.c.b16 %v186, %v184
    %v305 = vpack.c.b16 %v189, %v187
    %v306 = vpack.c.b16 %v190, %v188
    %v307 = vpack.c.b16 %v193, %v191
    %v308 = vpack.c.b16 %v194, %v192
    %v309 = vpack.c.b16 %v197, %v195
    %v310 = vpack.c.b16 %v198, %v196
    %v311 = vpack.c.b16 %v201, %v199
    %v312 = vpack.c.b16 %v202, %v200
    %v313 = vpack.c.b16 %v205, %v203
    %v314 = vpack.c.b16 %v206, %v204
    %v315 = vpack.c.b16 %v209, %v207
    %v316 = vpack.c.b16 %v210, %v208
    %v317 = vpack.c.b16 %v213, %v211
    %v318 = vpack.c.b16 %v214, %v212
    %v319 = vpack.c.b16 %v217, %v215
    %v320 = vpack.c.b16 %v218, %v216
    %v321 = vpack.c.b16 %v221, %v219
    %v322 = vpack.c.b16 %v222, %v220
    %v323 = vpack.c.b16 %v225, %v223
    %v324 = vpack.c.b16 %v226, %v224
    %v325 = vpack.c.b16 %v229, %v227
    %v326 = vpack.c.b16 %v230, %v228
    %v327 = vpack.c.b16 %v233, %v231
    %v328 = vpack.c.b16 %v234, %v232
    %v329 = vpack.c.b16 %v237, %v235
    %v330 = vpack.c.b16 %v238, %v236
    %v331 = vpack.c.b16 %v241, %v239
    %v332 = vpack.c.b16 %v242, %v240
    %v333 = vpack.c.b16 %v245, %v243
    %v334 = vpack.c.b16 %v246, %v244
    %v335 = vpack.c.b16 %v249, %v247
    %v336 = vpack.c.b16 %v250, %v248
    %v337 = vpack.c.b16 %v253, %v251
    %v338 = vpack.c.b16 %v254, %v252
    %v339 = vpack.c.b16 %v257, %v255
    %v340 = vpack.c.b16 %v258, %v256
    %v341 = vpack.c.b16 %v261, %v259
    %v342 = vpack.c.b16 %v262, %v260
    %v343 = vpack.c.b16 %v265, %v263
    %v344 = vpack.c.b16 %v266, %v264
    %v345 = vpack.c.b16 %v269, %v267
    %v346 = vpack.c.b16 %v270, %v268
    %v347 = vpack.c.b16 %v273, %v271
    %v348 = vpack.c.b16 %v274, %v272
    %v349 = vpack.c.b16 %v277, %v275
    %v350 = vpack.c.b16 %v278, %v276
    %v351 = vpack.c.b16 %v281, %v279
    %v352 = vpack.c.b16 %v282, %v280
    %v353 = vpack.c.b16 %v285, %v283
    %v354 = vpack.c.b16 %v286, %v284
    %v355 = vpack.c.b16 %v289, %v287
    %v356 = vpack.c.b16 %v290, %v288
    %v357 = vpack.c.b16 %v293, %v291
    %v358 = vpack.c.b16 %v294, %v292
    %423 = vmatprep.subr.bf16.mxu0 %v310
    %424 = vmatpush1.bf16.msra.mxu0 %v309
    %425 = vmatprep.subr.bf16.mxu0 %v308
    %426 = vmatpush1.bf16.msra.mxu0 %v307
    %427 = vmatprep.subr.bf16.mxu0 %v306
    %428 = vmatpush1.bf16.msra.mxu0 %v305
    %429 = vmatprep.subr.bf16.mxu0 %v304
    %430 = vmatpush1.bf16.msra.mxu0 %v303
    %431 = vmatprep.subr.bf16.mxu0 %v302
    %432 = vmatpush1.bf16.msra.mxu0 %v301
    %433 = vmatprep.subr.bf16.mxu0 %v300
    %434 = vmatpush1.bf16.msra.mxu0 %v299
    %435 = vmatprep.subr.bf16.mxu0 %v298
    %436 = vmatpush1.bf16.msra.mxu0 %v297
    %437 = vmatprep.subr.bf16.mxu0 %v296
    %438 = vmatpush1.bf16.msra.mxu0 %v295
    %439 = vmatprep.subr.bf16.mxu0 %v326
    %440 = vmatpush2.bf16.msra.mxu0 %v325
    %441 = vmatprep.subr.bf16.mxu0 %v324
    %442 = vmatpush2.bf16.msra.mxu0 %v323
    %443 = vmatprep.subr.bf16.mxu0 %v322
    %444 = vmatpush2.bf16.msra.mxu0 %v321
    %445 = vmatprep.subr.bf16.mxu0 %v320
    %446 = vmatpush2.bf16.msra.mxu0 %v319
    %447 = vmatprep.subr.bf16.mxu0 %v318
    %448 = vmatpush2.bf16.msra.mxu0 %v317
    %449 = vmatprep.subr.bf16.mxu0 %v316
    %450 = vmatpush2.bf16.msra.mxu0 %v315
    %451 = vmatprep.subr.bf16.mxu0 %v314
    %452 = vmatpush2.bf16.msra.mxu0 %v313
    %453 = vmatprep.subr.bf16.mxu0 %v312
    %454 = vmatpush2.bf16.msra.mxu0 %v311
    %455 = vmatprep.mubr.bf16.mxu0 %v24
    %456 = vmatmul.mubr.bf16.gmra.mxu0 %v23
    %v457 = vpop.f32.mrf.mxu0
    %v458 = vadd.f32 %v96, %v457
    %v459 = vpop.f32.mrf.mxu0
    %v460 = vadd.f32 %v100, %v459
    %v461 = vpop.f32.mrf.mxu0
    %v462 = vadd.f32 %v96, %v461
    %v463 = vpop.f32.mrf.mxu0
    %v464 = vadd.f32 %v100, %v463
    %465 = vdwg.mxu0
    %466 = vmatprep.subr.bf16.mxu0 %v342
    %467 = vmatpush1.bf16.msra.mxu0 %v341
    %468 = vmatprep.subr.bf16.mxu0 %v340
    %469 = vmatpush1.bf16.msra.mxu0 %v339
    %470 = vmatprep.subr.bf16.mxu0 %v338
    %471 = vmatpush1.bf16.msra.mxu0 %v337
    %472 = vmatprep.subr.bf16.mxu0 %v336
    %473 = vmatpush1.bf16.msra.mxu0 %v335
    %474 = vmatprep.subr.bf16.mxu0 %v334
    %475 = vmatpush1.bf16.msra.mxu0 %v333
    %476 = vmatprep.subr.bf16.mxu0 %v332
    %477 = vmatpush1.bf16.msra.mxu0 %v331
    %478 = vmatprep.subr.bf16.mxu0 %v330
    %479 = vmatpush1.bf16.msra.mxu0 %v329
    %480 = vmatprep.subr.bf16.mxu0 %v328
    %481 = vmatpush1.bf16.msra.mxu0 %v327
    %482 = vmatprep.subr.bf16.mxu0 %v358
    %483 = vmatpush2.bf16.msra.mxu0 %v357
    %484 = vmatprep.subr.bf16.mxu0 %v356
    %485 = vmatpush2.bf16.msra.mxu0 %v355
    %486 = vmatprep.subr.bf16.mxu0 %v354
    %487 = vmatpush2.bf16.msra.mxu0 %v353
    %488 = vmatprep.subr.bf16.mxu0 %v352
    %489 = vmatpush2.bf16.msra.mxu0 %v351
    %490 = vmatprep.subr.bf16.mxu0 %v350
    %491 = vmatpush2.bf16.msra.mxu0 %v349
    %492 = vmatprep.subr.bf16.mxu0 %v348
    %493 = vmatpush2.bf16.msra.mxu0 %v347
    %494 = vmatprep.subr.bf16.mxu0 %v346
    %495 = vmatpush2.bf16.msra.mxu0 %v345
    %496 = vmatprep.subr.bf16.mxu0 %v344
    %497 = vmatpush2.bf16.msra.mxu0 %v343
    %498 = vmatprep.mubr.bf16.mxu0 %v26
    %499 = vmatmul.mubr.bf16.gmra.mxu0 %v25
    %v500 = vpop.f32.mrf.mxu0
    %v501 = vadd.f32 %v458, %v500
    %v502 = vpop.f32.mrf.mxu0
    %v503 = vadd.f32 %v460, %v502
    %v504 = vpop.f32.mrf.mxu0
    %v505 = vadd.f32 %v462, %v504
    %v506 = vpop.f32.mrf.mxu0
    %v507 = vadd.f32 %v464, %v506
    %508 = vdwg.mxu0
    %509 = vst [vmem:[#allocation2] sm:$0xff] %v501
    %vm510 = vcmask 523264
    %511 = vst.msk [vmem:[#allocation2 + $0x8] sm:$0xff] %vm510, %v503
    %512 = vst [vmem:[#allocation2 + $0x10] sm:$0xff] %v505
    %513 = vst.msk [vmem:[#allocation2 + $0x18] sm:$0xff] %vm510, %v507
    // Predicated region
    $region14: #{tpu_custom_call.1} parent=1 // pred_check
      _
    $region15: #{tpu_custom_call.1} parent=1 // pred_check_branch
      %515 = sbr.rel (0) target = $region17
    $region16: #{tpu_custom_call.1} parent=1 // pred_region
      %s517 = ssub.s32 512, 512
      %518 = vsyncadd [#allocation3], %s517
      %s519 = sshll.u32 [#allocation2], 4
      %s520 = int_to_ptr.vmem [resolvable:$true] %s519
      %525 = dma.vmem_to_hbm [thread:$0]  %s520, 512, %s3, [#allocation3], 256, 256, 16
    $region17: #{tpu_custom_call.1} parent=1 // pred_fallthru
      _
    // Predicated region
    $region18: #{tpu_custom_call.1} parent=1 // pred_check
      _
    $region19: #{tpu_custom_call.1} parent=1 // pred_check_branch
      %527 = sbr.rel (0) target = $region21
    $region20: #{tpu_custom_call.1} parent=1 // pred_region
      %528 = dma.done [#allocation3], 512
    $region21: #{tpu_custom_call.1} parent=1 // pred_fallthru
      _
    %529 = vsyncpa [#allocation3], 1

</llo_original>
